<compile_context>
chip_gen: v7x
topology: tpu7x:2x2x1
jax: 0.10.0
libtpu: 0.0.40
codegen_flags: <defaults>
</compile_context>

<pallas_src>
import math
import functools

import jax
import jax.numpy as jnp
from jax import lax
from jax.experimental import pallas as pl
from jax.experimental.pallas import tpu as pltpu


# ---------------------------------------------------------------------------
# Utilities
# ---------------------------------------------------------------------------
def _default_vmem_limit(frac=0.70):
    """Scoped-VMEM limit derived from the chip's physical VMEM capacity
    (v5e/v6e: 128 MiB, v7x: 64 MiB).  Falls back to a value that is safe on
    every generation if the query is unavailable."""
    try:
        cap = int(pltpu.get_tpu_info().vmem_capacity_bytes)
    except Exception:  # pragma: no cover - older jax / no device info
        cap = 64 * 1024 * 1024
    return max(int(cap * frac), 32 * 1024 * 1024)


def _pick_tile(dim, target, aligns=(256, 128, 8)):
    """Largest divisor of `dim` that is <= `target` and a multiple of one of
    `aligns` (tried in order).  Dims <= target are left untiled (full dim)."""
    if dim <= target:
        return dim
    for a in aligns:
        t = (target // a) * a
        while t >= a:
            if dim % t == 0:
                return t
            t -= a
    return dim  # awkward size: fall back to full dim (caller asserts footprint)


# ---------------------------------------------------------------------------
# Tiled linear kernel:  y = x @ Wt + b     (PyTorch F.linear semantics, with
# the weight pre-transposed to (K, Nout) at trace time)
#   x: (M, K)  Wt: (K, Nout)  b: (Nout,)  ->  y: (M, Nout)
# Grid (M/tm, Nout/tn, K/tk); f32 accumulator in VMEM scratch.
# ---------------------------------------------------------------------------
def _linear_kernel(x_ref, wt_ref, b_ref, o_ref, acc_ref):
    @pl.when(pl.program_id(2) == 0)
    def _():
        acc_ref[...] = jnp.zeros_like(acc_ref)

    # Canonical (tm, tk) x (tk, tn) MXU feed -- no per-tile weight relayout.
    acc_ref[...] += lax.dot_general(
        x_ref[...], wt_ref[...],
        dimension_numbers=(((1,), (0,)), ((), ())),
        preferred_element_type=jnp.float32)

    @pl.when(pl.program_id(2) == pl.num_programs(2) - 1)
    def _():
        o_ref[...] = (acc_ref[...] + b_ref[...].astype(jnp.float32)
                      ).astype(o_ref.dtype)


def pallas_linear(x, w_t, b, *, out_dtype=jnp.float32,
                  tm=512, tn=1024, tk=1024, vmem_limit=None):
    """y = x @ w_t + b  with x:(M,K), w_t:(K,Nout) pre-transposed, b:(Nout,)."""
    M, K = x.shape
    K2, Nout = w_t.shape
    assert K == K2
    if vmem_limit is None:
        vmem_limit = _default_vmem_limit()

    tm = _pick_tile(M, tm, aligns=(16, 8))        # 16-aligned: bf16 packing
    tn = _pick_tile(Nout, tn, aligns=(256, 128))  # 256-aligned: v6e/v7x MXU
    tk = _pick_tile(K, tk, aligns=(256, 128))

    ib = jnp.dtype(x.dtype).itemsize
    ob = jnp.dtype(out_dtype).itemsize
    est = (2 * (tm * tk + tk * tn) * ib + 2 * tm * tn * ob
           + tm * tn * 4 + 2 * tn * 4)
    assert est <= vmem_limit, (
        f"pallas_linear tile footprint {est} B exceeds VMEM budget "
        f"{vmem_limit} B for shapes {x.shape} x {w_t.shape}; reduce tm/tn/tk.")

    b2 = b.reshape(1, Nout).astype(jnp.float32)
    return pl.pallas_call(
        _linear_kernel,
        out_shape=jax.ShapeDtypeStruct((M, Nout), out_dtype),
        grid_spec=pltpu.PrefetchScalarGridSpec(
            num_scalar_prefetch=0,
            grid=(M // tm, Nout // tn, K // tk),
            in_specs=[
                pl.BlockSpec((tm, tk), lambda i, j, k: (i, k)),
                pl.BlockSpec((tk, tn), lambda i, j, k: (k, j)),
                pl.BlockSpec((1, tn), lambda i, j, k: (0, j)),
            ],
            out_specs=pl.BlockSpec((tm, tn), lambda i, j, k: (i, j)),
            scratch_shapes=[pltpu.VMEM((tm, tn), jnp.float32)],
        ),
        compiler_params=pltpu.CompilerParams(
            dimension_semantics=("parallel", "parallel", "arbitrary"),
            vmem_limit_bytes=vmem_limit),
    )(x, w_t, b2)


# ---------------------------------------------------------------------------
# Attention kernels.  One (batch, head) pair per grid step; q:(L,hd),
# k/v:(S,hd) (or (Sb,hd) blocks on the flash path).  Scores/softmax in f32,
# MXU operands in the compute dtype (bf16).
# ---------------------------------------------------------------------------
def _attn_weights_kernel(q_ref, k_ref, v_ref, o_ref, w_ref, *, num_heads):
    h = pl.program_id(1)
    q = q_ref[...]                                          # (L, hd)
    k = k_ref[...]                                          # (S, hd)
    v = v_ref[...]                                          # (S, hd)

    s = lax.dot_general(q, k, (((1,), (1,)), ((), ())),
                        preferred_element_type=jnp.float32)  # (L, S)
    s = s - jnp.max(s, axis=-1, keepdims=True)
    e = jnp.exp(s)
    # Exact normalization: the weights are user-visible output.
    inv = 1.0 / jnp.sum(e, axis=-1, keepdims=True)
    p = e * inv                                              # (L, S) f32

    o = lax.dot_general(p.astype(v.dtype), v, (((1,), (0,)), ((), ())),
                        preferred_element_type=jnp.float32)  # (L, hd)
    o_ref[...] = o.astype(o_ref.dtype)

    # Head-averaged weights accumulate in the resident (L, S) output block
    # (same block index for every head -> written back to HBM once per batch).
    @pl.when(h == 0)
    def _():
        w_ref[...] = jnp.zeros_like(w_ref)
    w_ref[...] += (p * (1.0 / num_heads)).astype(w_ref.dtype)


def _attn_flash_kernel(q_ref, k_ref, v_ref, o_ref, m_ref, l_ref, acc_ref):
    # Online softmax over S blocks; q resident, k/v streamed per block.
    s_idx = pl.program_id(1)

    @pl.when(s_idx == 0)
    def _():
        m_ref[...] = jnp.full_like(m_ref, -jnp.inf)
        l_ref[...] = jnp.zeros_like(l_ref)
        acc_ref[...] = jnp.zeros_like(acc_ref)

    q = q_ref[...]                                           # (L, hd)
    k = k_ref[...]                                           # (Sb, hd)
    v = v_ref[...]                                           # (Sb, hd)

    s = lax.dot_general(q, k, (((1,), (1,)), ((), ())),
                        preferred_element_type=jnp.float32)  # (L, Sb)
    m_prev = m_ref[...]
    m_new = jnp.maximum(m_prev, jnp.max(s, axis=-1, keepdims=True))
    alpha = jnp.exp(m_prev - m_new)
    e = jnp.exp(s - m_new)
    l_ref[...] = alpha * l_ref[...] + jnp.sum(e, axis=-1, keepdims=True)
    acc_ref[...] = alpha * acc_ref[...] + lax.dot_general(
        e.astype(v.dtype), v, (((1,), (0,)), ((), ())),
        preferred_element_type=jnp.float32)
    m_ref[...] = m_new

    @pl.when(s_idx == pl.num_programs(1) - 1)
    def _():
        # Normalize once after the PV accumulation: O(L*hd), not O(L*S).
        o_ref[...] = (acc_ref[...] * pl.reciprocal(l_ref[...], approx=True)
                      ).astype(o_ref.dtype)


def pallas_attention(q_t, k_t=None, v_t=None, *, packed, need_weights=True,
                     s_block_target=256, weights_dtype=jnp.float32,
                     vmem_limit=None):
    """Multi-head attention on head-major inputs.

    packed=True : q_t is a single (3, N, H, L, hd) array holding q/k/v (fused
                  self-attention QKV projection); it is passed three times so
                  each operand gets its own BlockSpec -> no HBM slice copies.
    packed=False: q_t (N, H, L, hd), k_t / v_t (N, H, S, hd).
    Scaling must already be folded into q.
    """
    if packed:
        qkv_t = q_t
        _, N, H, L, hd = qkv_t.shape
        S = L
        operands = (qkv_t, qkv_t, qkv_t)
    else:
        N, H, L, hd = q_t.shape
        S = k_t.shape[2]
        operands = (q_t, k_t, v_t)
    dtype = operands[0].dtype
    if vmem_limit is None:
        vmem_limit = _default_vmem_limit()

    if need_weights:
        # Per-step footprint check (full-S softmax is inherent to returning
        # the (N, L, S) weights).  Fail early with a clear message.
        itemsize = jnp.dtype(dtype).itemsize
        est = 4 * L * S * 4 + 2 * (L + 2 * S) * hd * itemsize + L * hd * 4
        assert est <= vmem_limit, (
            f"need_weights=True needs ~{est} B of VMEM per (batch,head) step "
            f"(budget {vmem_limit} B); use need_weights=False or reduce L/S.")

        if packed:
            q_spec = pl.BlockSpec((None, None, None, L, hd),
                                  lambda b, h: (0, b, h, 0, 0))
            k_spec = pl.BlockSpec((None, None, None, S, hd),
                                  lambda b, h: (1, b, h, 0, 0))
            v_spec = pl.BlockSpec((None, None, None, S, hd),
                                  lambda b, h: (2, b, h, 0, 0))
        else:
            q_spec = pl.BlockSpec((None, None, L, hd), lambda b, h: (b, h, 0, 0))
            k_spec = pl.BlockSpec((None, None, S, hd), lambda b, h: (b, h, 0, 0))
            v_spec = pl.BlockSpec((None, None, S, hd), lambda b, h: (b, h, 0, 0))
        o_spec = pl.BlockSpec((None, None, L, hd), lambda b, h: (b, h, 0, 0))
        w_spec = pl.BlockSpec((None, L, S), lambda b, h: (b, 0, 0))

        # TODO(synk): when N == 1 the only "parallel" axis has extent 1; a
        #             v7x megacore split would need an L-block parallel axis.
        out, w = pl.pallas_call(
            functools.partial(_attn_weights_kernel, num_heads=H),
            out_shape=(jax.ShapeDtypeStruct((N, H, L, hd), dtype),
                       jax.ShapeDtypeStruct((N, L, S), weights_dtype)),
            grid_spec=pltpu.PrefetchScalarGridSpec(
                num_scalar_prefetch=0,
                grid=(N, H),
                in_specs=[q_spec, k_spec, v_spec],
                out_specs=[o_spec, w_spec]),
            compiler_params=pltpu.CompilerParams(
                dimension_semantics=("parallel", "arbitrary"),
                vmem_limit_bytes=vmem_limit),
        )(*operands)
        return out, w

    # ---- need_weights=False: flash-style online softmax over S blocks ----
    Sb = _pick_tile(S, s_block_target, aligns=(256, 128, 8))
    n_s = S // Sb
    if packed:
        q_spec = pl.BlockSpec((None, None, None, L, hd),
                              lambda i, s: (0, i // H, i % H, 0, 0))
        k_spec = pl.BlockSpec((None, None, None, Sb, hd),
                              lambda i, s: (1, i // H, i % H, s, 0))
        v_spec = pl.BlockSpec((None, None, None, Sb, hd),
                              lambda i, s: (2, i // H, i % H, s, 0))
    else:
        q_spec = pl.BlockSpec((None, None, L, hd),
                              lambda i, s: (i // H, i % H, 0, 0))
        k_spec = pl.BlockSpec((None, None, Sb, hd),
                              lambda i, s: (i // H, i % H, s, 0))
        v_spec = pl.BlockSpec((None, None, Sb, hd),
                              lambda i, s: (i // H, i % H, s, 0))
    o_spec = pl.BlockSpec((None, None, L, hd), lambda i, s: (i // H, i % H, 0, 0))

    out = pl.pallas_call(
        _attn_flash_kernel,
        out_shape=jax.ShapeDtypeStruct((N, H, L, hd), dtype),
        grid_spec=pltpu.PrefetchScalarGridSpec(
            num_scalar_prefetch=0,
            grid=(N * H, n_s),   # flat parallel axis -> both TCs busy at N=1
            in_specs=[q_spec, k_spec, v_spec],
            out_specs=o_spec,
            scratch_shapes=[pltpu.VMEM((L, 1), jnp.float32),
                            pltpu.VMEM((L, 1), jnp.float32),
                            pltpu.VMEM((L, hd), jnp.float32)]),
        compiler_params=pltpu.CompilerParams(
            dimension_semantics=("parallel", "arbitrary"),
            vmem_limit_bytes=vmem_limit),
    )(*operands)
    return out, None


# ---------------------------------------------------------------------------
# Full forward pass (mirrors multi_head_attention_forward, default flags:
# bias=True, add_bias_kv=False, add_zero_attn=False, dropout=0, no masks).
# ---------------------------------------------------------------------------
def multihead_attention_forward(query, key, value, params, num_heads,
                                attn_mult=1.0, standparam=False,
                                need_weights=True,
                                compute_dtype=jnp.bfloat16,
                                out_dtype=jnp.float32):
    L, N, E = query.shape
    S = key.shape[0]
    H = num_heads
    hd = E // H
    assert hd * H == E, "embed_dim must be divisible by num_heads"

    if standparam:
        scaling = float(hd) ** (-0.5) * math.sqrt(attn_mult)
    else:
        scaling = float(hd) ** (-1.0) * math.sqrt(attn_mult)

    in_w = params["in_proj_weight"].astype(jnp.float32)       # (3E, E)
    in_b = params["in_proj_bias"].astype(jnp.float32)         # (3E,)
    out_b = params["out_proj_bias"].astype(jnp.float32)       # (E,)

    # Fold the mup scaling into the q rows of the input projection (free:
    # (x @ Wq^T + bq) * s == x @ (s*Wq)^T + s*bq).
    in_w = in_w.at[:E].multiply(scaling)
    in_b = in_b.at[:E].multiply(scaling)

    # Pre-transpose the (small) weights once at trace time -> canonical MXU
    # feed in the linear kernel.  In a real model, store them transposed.
    in_wt = in_w.T.astype(compute_dtype)                       # (E, 3E)
    out_wt = params["out_proj_weight"].T.astype(compute_dtype)  # (E, E)

    if query is key and key is value:
        # Self-attention: single fused QKV projection (x read from HBM once).
        x = query.reshape(L * N, E).astype(compute_dtype)
        qkv = pallas_linear(x, in_wt, in_b, out_dtype=compute_dtype)  # (L*N, 3E)
        # (L*N, 3E) -> (L, N, 3, H, hd) is a pure reshape; one fused transpose
        # yields the packed head-major layout -> no per-tensor slice/swapaxes.
        qkv_t = jnp.transpose(qkv.reshape(L, N, 3, H, hd), (2, 1, 3, 0, 4))
        attn_out, attn_w = pallas_attention(qkv_t, packed=True,
                                            need_weights=need_weights)
    else:
        q = pallas_linear(query.reshape(L * N, E).astype(compute_dtype),
                          in_wt[:, :E], in_b[:E], out_dtype=compute_dtype)
        k = pallas_linear(key.reshape(S * N, E).astype(compute_dtype),
                          in_wt[:, E:2 * E], in_b[E:2 * E],
                          out_dtype=compute_dtype)
        v = pallas_linear(value.reshape(S * N, E).astype(compute_dtype),
                          in_wt[:, 2 * E:], in_b[2 * E:],
                          out_dtype=compute_dtype)
        q_t = jnp.transpose(q.reshape(L, N, H, hd), (1, 2, 0, 3))
        k_t = jnp.transpose(k.reshape(S, N, H, hd), (1, 2, 0, 3))
        v_t = jnp.transpose(v.reshape(S, N, H, hd), (1, 2, 0, 3))
        attn_out, attn_w = pallas_attention(q_t, k_t, v_t, packed=False,
                                            need_weights=need_weights)

    # merge heads: (N, H, L, hd) -> (L, N, E)  (single transpose pass)
    attn_out = jnp.transpose(attn_out, (2, 0, 1, 3)).reshape(L * N, E)

    # output projection (f32 result by default; pass out_dtype=bf16 to halve
    # the HBM write if the consumer accepts it)
    attn_out = pallas_linear(attn_out, out_wt, out_b,
                             out_dtype=out_dtype).reshape(L, N, E)
    return attn_out, attn_w


# ---------------------------------------------------------------------------
# Deterministic parameter init, mirroring MultiheadAttention._reset_parameters
# ---------------------------------------------------------------------------
def init_params(key, embed_dim, encoder_var=1.0):
    sigma = (encoder_var / embed_dim) ** 0.5
    k1, k2 = jax.random.split(key)
    in_w = sigma * jax.random.normal(k1, (3 * embed_dim, embed_dim), jnp.float32)
    in_w = in_w.at[:embed_dim].set(0.0)
    out_w = sigma * jax.random.normal(k2, (embed_dim, embed_dim), jnp.float32)
    return {
        "in_proj_weight": in_w,
        "in_proj_bias": jnp.zeros((3 * embed_dim,), jnp.float32),
        "out_proj_weight": out_w,
        "out_proj_bias": jnp.zeros((embed_dim,), jnp.float32),
    }


# ---------------------------------------------------------------------------
# Pure-JAX f32 reference (same math, no Pallas) for validation.
# ---------------------------------------------------------------------------
def reference_forward(query, key, value, params, num_heads,
                      attn_mult=1.0, standparam=False):
    L, N, E = query.shape
    S = key.shape[0]
    hd = E // num_heads
    if standparam:
        scaling = float(hd) ** (-0.5) * math.sqrt(attn_mult)
    else:
        scaling = float(hd) ** (-1.0) * math.sqrt(attn_mult)
    in_w, in_b = params["in_proj_weight"], params["in_proj_bias"]
    q = query @ in_w[:E].T + in_b[:E]
    k = key @ in_w[E:2 * E].T + in_b[E:2 * E]
    v = value @ in_w[2 * E:].T + in_b[2 * E:]
    q = (q * scaling).reshape(L, N * num_heads, hd).swapaxes(0, 1)
    k = k.reshape(S, N * num_heads, hd).swapaxes(0, 1)
    v = v.reshape(S, N * num_heads, hd).swapaxes(0, 1)
    s = jnp.einsum("bld,bsd->bls", q, k)
    p = jax.nn.softmax(s, axis=-1)
    o = jnp.einsum("bls,bsd->bld", p, v)
    o = o.swapaxes(0, 1).reshape(L, N, E)
    o = o @ params["out_proj_weight"].T + params["out_proj_bias"]
    w = p.reshape(N, num_heads, L, S).sum(axis=1) / num_heads
    return o, w


if __name__ == "__main__":
    # Small shapes: L=S=8 (self-attention), batch N=2, embed E=32, heads=4
    L, N, E, H = 8, 2, 32, 4
    root = jax.random.PRNGKey(0)
    k_x, k_p, k_q = jax.random.split(root, 3)

    x = jax.random.normal(k_x, (L, N, E), jnp.float32)
    params = init_params(k_p, E, encoder_var=1.0)

    # --- 1: faithful module init, fused self-attention path (need_weights) ---
    out, w = multihead_attention_forward(x, x, x, params, num_heads=H)
    out = jax.block_until_ready(out)
    w = jax.block_until_ready(w)
    ref_out, ref_w = reference_forward(x, x, x, params, num_heads=H)
    assert out.shape == (L, N, E)
    assert w.shape == (N, L, L)
    assert jnp.allclose(out, ref_out, atol=5e-2, rtol=5e-2), "attn_output mismatch (1)"
    assert jnp.allclose(w, ref_w, atol=5e-2, rtol=5e-2), "attn_weights mismatch (1)"

    # --- 2: non-trivial q projection + separate-projection code path ---
    params2 = dict(params)
    params2["in_proj_weight"] = (1.0 / math.sqrt(E)) * jax.random.normal(
        k_q, (3 * E, E), jnp.float32)
    kv = x * 1.0   # same values, distinct array object -> non-fused path
    out2, w2 = multihead_attention_forward(x, kv, kv, params2, num_heads=H)
    out2 = jax.block_until_ready(out2)
    w2 = jax.block_until_ready(w2)
    ref_out2, ref_w2 = reference_forward(x, x, x, params2, num_heads=H)
    assert jnp.allclose(out2, ref_out2, atol=5e-2, rtol=5e-2), "attn_output mismatch (2)"
    assert jnp.allclose(w2, ref_w2, atol=5e-2, rtol=5e-2), "attn_weights mismatch (2)"

    # --- 3: need_weights=False fast path (flash / online softmax), fused QKV ---
    out3, w3 = multihead_attention_forward(x, x, x, params2, num_heads=H,
                                           need_weights=False)
    out3 = jax.block_until_ready(out3)
    assert w3 is None
    assert jnp.allclose(out3, ref_out2, atol=5e-2, rtol=5e-2), "attn_output mismatch (3)"

    # --- 4: need_weights=False, separate-projection path ---
    out4, w4 = multihead_attention_forward(x, kv, kv, params2, num_heads=H,
                                           need_weights=False)
    out4 = jax.block_until_ready(out4)
    assert w4 is None
    assert jnp.allclose(out4, ref_out2, atol=5e-2, rtol=5e-2), "attn_output mismatch (4)"

    print("KERNEL_OK")
</pallas_src>

<mosaic_0001>
module attributes {stable_mosaic.version = 11 : i64} {
  func.func @_linear_kernel(%arg0: i32, %arg1: i32, %arg2: i32, %arg3: memref<16x32xbf16, #tpu.memory_space<vmem>>, %arg4: memref<32x96xbf16, #tpu.memory_space<vmem>>, %arg5: memref<1x96xf32, #tpu.memory_space<vmem>>, %arg6: memref<16x96xbf16, #tpu.memory_space<vmem>>, %arg7: memref<16x96xf32, #tpu.memory_space<vmem>>) attributes {dimension_semantics = [#tpu.dimension_semantics<parallel>, #tpu.dimension_semantics<parallel>, #tpu.dimension_semantics<arbitrary>], iteration_bounds = array<i64: 1, 1, 1>, scalar_prefetch = 0 : i64, scratch_operands = 1 : i64, tpu.core_type = #tpu.core_type<tc>, window_params = [{transform_indices = @transform_0, window_bounds = array<i64: 16, 32>}, {transform_indices = @transform_1, window_bounds = array<i64: 32, 96>}, {transform_indices = @transform_2, window_bounds = array<i64: 1, 96>}, {transform_indices = @transform_3, window_bounds = array<i64: 16, 96>}]} {
    %c0_i32 = arith.constant 0 : i32
    %0 = arith.cmpi eq, %arg2, %c0_i32 : i32
    %1 = arith.extui %0 : i1 to i32
    %c0_i32_0 = arith.constant 0 : i32
    %2 = arith.cmpi ne, %1, %c0_i32_0 : i32
    scf.if %2 {
      %cst_10 = arith.constant 0.000000e+00 : f32
      %12 = vector.broadcast %cst_10 : f32 to vector<16x96xf32>
      %c0_11 = arith.constant 0 : index
      %c0_12 = arith.constant 0 : index
      %13 = vector.load %arg7[%c0_11, %c0_12] : memref<16x96xf32, #tpu.memory_space<vmem>>, vector<16x96xf32>
      tpu.vector_store %arg7[%c0_11, %c0_12], %12 {strides = array<i32>} : memref<16x96xf32, #tpu.memory_space<vmem>>, vector<16x96xf32>,
    } else {
    }
    %c0 = arith.constant 0 : index
    %c0_1 = arith.constant 0 : index
    %3 = vector.load %arg7[%c0, %c0_1] : memref<16x96xf32, #tpu.memory_space<vmem>>, vector<16x96xf32>
    %c0_2 = arith.constant 0 : index
    %c0_3 = arith.constant 0 : index
    %4 = vector.load %arg3[%c0_2, %c0_3] : memref<16x32xbf16, #tpu.memory_space<vmem>>, vector<16x32xbf16>
    %c0_4 = arith.constant 0 : index
    %c0_5 = arith.constant 0 : index
    %5 = vector.load %arg4[%c0_4, %c0_5] : memref<32x96xbf16, #tpu.memory_space<vmem>>, vector<32x96xbf16>
    %cst = arith.constant dense<0.000000e+00> : vector<16x96xf32>
    %6 = tpu.matmul %4, %5, %cst {dimension_numbers = #tpu.dot_dimension_numbers<[1], [0], [0], [1], [0, 0, 1, 1], [], []>} : vector<16x32xbf16>, vector<32x96xbf16>, vector<16x96xf32> -> vector<16x96xf32>
    %7 = arith.addf %3, %6 : vector<16x96xf32>
    %c0_6 = arith.constant 0 : index
    %c0_7 = arith.constant 0 : index
    %8 = vector.load %arg7[%c0_6, %c0_7] : memref<16x96xf32, #tpu.memory_space<vmem>>, vector<16x96xf32>
    tpu.vector_store %arg7[%c0_6, %c0_7], %7 {strides = array<i32>} : memref<16x96xf32, #tpu.memory_space<vmem>>, vector<16x96xf32>,
    %c0_i32_8 = arith.constant 0 : i32
    %9 = arith.cmpi eq, %arg2, %c0_i32_8 : i32
    %10 = arith.extui %9 : i1 to i32
    %c0_i32_9 = arith.constant 0 : i32
    %11 = arith.cmpi ne, %10, %c0_i32_9 : i32
    scf.if %11 {
      %c0_10 = arith.constant 0 : index
      %c0_11 = arith.constant 0 : index
      %12 = vector.load %arg7[%c0_10, %c0_11] : memref<16x96xf32, #tpu.memory_space<vmem>>, vector<16x96xf32>
      %c0_12 = arith.constant 0 : index
      %c0_13 = arith.constant 0 : index
      %13 = vector.load %arg5[%c0_12, %c0_13] : memref<1x96xf32, #tpu.memory_space<vmem>>, vector<1x96xf32>
      %14 = vector.broadcast %13 : vector<1x96xf32> to vector<16x96xf32>
      %15 = arith.addf %12, %14 : vector<16x96xf32>
      %16 = arith.truncf %15 : vector<16x96xf32> to vector<16x96xbf16>
      %c0_14 = arith.constant 0 : index
      %c0_15 = arith.constant 0 : index
      %17 = vector.load %arg6[%c0_14, %c0_15] : memref<16x96xbf16, #tpu.memory_space<vmem>>, vector<16x96xbf16>
      tpu.vector_store %arg6[%c0_14, %c0_15], %16 {strides = array<i32>} : memref<16x96xbf16, #tpu.memory_space<vmem>>, vector<16x96xbf16>,
    } else {
    }
    return
  }
  func.func @transform_0(%arg0: i32, %arg1: i32, %arg2: i32) -> (i32, i32) {
    %c0_i32 = arith.constant 0 : i32
    return %arg0, %arg2 : i32, i32
  }
  func.func @transform_1(%arg0: i32, %arg1: i32, %arg2: i32) -> (i32, i32) {
    %c0_i32 = arith.constant 0 : i32
    return %arg2, %arg1 : i32, i32
  }
  func.func @transform_2(%arg0: i32, %arg1: i32, %arg2: i32) -> (i32, i32) {
    %c0_i32 = arith.constant 0 : i32
    %c0_i32_0 = arith.constant 0 : i32
    return %c0_i32, %arg1 : i32, i32
  }
  func.func @transform_3(%arg0: i32, %arg1: i32, %arg2: i32) -> (i32, i32) {
    %c0_i32 = arith.constant 0 : i32
    return %arg0, %arg1 : i32, i32
  }
}

</mosaic_0001>

<llo_original>
// kernel: tpu_custom_call.1
$region0: #{tpu_custom_call.1}
  #allocation0 [shape = 'u32[]', space=smem, size = 0x4, offset = 0x4, fixed_abs, tag = 'smem constant byte address 0x4 - core index']
  #allocation1 [shape = 'u32[144,128]{1,0:T(1,128)}', space=vmem, size = 0x12000, scoped, tag = 'internal scratch']
  #allocation2 [shape = 'f32[16,96]{1,0:T(8,128)}', space=vmem, size = 0x2000, scoped, tag = 'scratch operand']
  %s0 = inlined_call_operand.hbm [shape: bf16[16,32], index: 0, kind: input, shape index: {}]
  %s1 = inlined_call_operand.hbm [shape: bf16[32,96], index: 1, kind: input, shape index: {}]
  %s2 = inlined_call_operand.vmem [shape: f32[1,96], index: 2, kind: input, shape index: {}]
  %s3 = inlined_call_operand.hbm [shape: bf16[16,96], index: 3, kind: output, shape index: {}]
  %s4 = sld [smem:[#allocation0]]
  $region38: #{tpu_custom_call.1} parent=0
    _
  %s6 = ssub.s32 1, %s4
  %s7 = scalar_select 0, %s6, %s4
  $region1: #{tpu_custom_call.1} parent=0
    #allocation3 [shape = 'u8[4096]{0}', space=vmem, size = 0x1000, scoped, tag = 'input window, operand 0, single buffered']
    #allocation4 [shape = 's32[1]{0}', space=sflag, size = 0x4, scoped, tag = 'scoped memory for tpu_custom_call.1']
    #allocation5 [shape = 's32[1]{0}', space=sflag, size = 0x4, scoped, tag = 'scoped memory for tpu_custom_call.1']
    #allocation6 [shape = 'u8[8192]{0}', space=vmem, size = 0x2000, scoped, tag = 'input window, operand 1, single buffered']
    #allocation7 [shape = 's32[1]{0}', space=sflag, size = 0x4, scoped, tag = 'scoped memory for tpu_custom_call.1']
    #allocation8 [shape = 'u8[4096]{0}', space=vmem, size = 0x1000, scoped, tag = 'output window, operand 0, single buffered']
    %8 = vsyncpa [#allocation4], 0
    %9 = vsyncpa [#allocation7], 0
    %10 = vsyncpa [#allocation5], 0
    // Predicated region
    $region2: #{tpu_custom_call.1} parent=1 // pred_check
      _
    $region3: #{tpu_custom_call.1} parent=1 // pred_check_branch
      %12 = sbr.rel (0) target = $region5
    $region4: #{tpu_custom_call.1} parent=1 // pred_region
      %s14 = ssub.s32 128, 128
      %15 = vsyncadd [#allocation4], %s14
      %s16 = sshll.u32 [#allocation3], 4
      %s17 = int_to_ptr.vmem [resolvable:$true] %s16
      %22 = dma.hbm_to_vmem [thread:$0]  %s0, 128, %s17, [#allocation4], 64, 64, 4
    $region5: #{tpu_custom_call.1} parent=1 // pred_fallthru
      _
    // Predicated region
    $region6: #{tpu_custom_call.1} parent=1 // pred_check
      _
    $region7: #{tpu_custom_call.1} parent=1 // pred_check_branch
      %24 = sbr.rel (0) target = $region9
    $region8: #{tpu_custom_call.1} parent=1 // pred_region
      %s26 = ssub.s32 256, 256
      %27 = vsyncadd [#allocation7], %s26
      %s28 = sshll.u32 [#allocation6], 4
      %s29 = int_to_ptr.vmem [resolvable:$true] %s28
      %34 = dma.hbm_to_vmem [thread:$0]  %s1, 256, %s29, [#allocation7], 64, 64, 4
    $region9: #{tpu_custom_call.1} parent=1 // pred_fallthru
      _
    // Predicated region
    $region10: #{tpu_custom_call.1} parent=1 // pred_check
      _
    $region11: #{tpu_custom_call.1} parent=1 // pred_check_branch
      %36 = sbr.rel (0) target = $region13
    $region12: #{tpu_custom_call.1} parent=1 // pred_region
      _
    $region13: #{tpu_custom_call.1} parent=1 // pred_fallthru
      _
    // Predicated region
    $region14: #{tpu_custom_call.1} parent=1 // pred_check
      _
    $region15: #{tpu_custom_call.1} parent=1 // pred_check_branch
      %38 = sbr.rel (0) target = $region17
    $region16: #{tpu_custom_call.1} parent=1 // pred_region
      %39 = dma.done [#allocation4], 128
    $region17: #{tpu_custom_call.1} parent=1 // pred_fallthru
      _
    // Predicated region
    $region18: #{tpu_custom_call.1} parent=1 // pred_check
      _
    $region19: #{tpu_custom_call.1} parent=1 // pred_check_branch
      %41 = sbr.rel (0) target = $region21
    $region20: #{tpu_custom_call.1} parent=1 // pred_region
      %42 = dma.done [#allocation7], 256
    $region21: #{tpu_custom_call.1} parent=1 // pred_fallthru
      _
    %p44 = scmp.eq.s32.totalorder 0, 0
    // Predicated region
    $region22: #{tpu_custom_call.1} parent=1 // pred_check
      %p45 = pneg %p44
    $region23: #{tpu_custom_call.1} parent=1 // pred_check_branch
      %47 = sbr.rel (%p45) target = $region25
    $region24: #{tpu_custom_call.1} parent=1 // pred_region
      %vm48 = vcmask 785408
      %49 = vst.msk [vmem:[#allocation2] sm:$0xff] %vm48, 0.0
      %50 = vst.msk [vmem:[#allocation2 + $0x8] sm:$0xff] %vm48, 0.0
    $region25: #{tpu_custom_call.1} parent=1 // pred_fallthru
      _
    %v51 = vld [vmem:[#allocation2] sm:$0xff]
    %v52 = vld [vmem:[#allocation2 + $0x8] sm:$0xff]
    %v53 = vld [vmem:[#allocation3] sm:$0xf]
    %v54 = vld [vmem:[#allocation3 + $0x4] sm:$0xf]
    %v55 = vld [vmem:[#allocation6] sm:$0xf]
    %v56 = vld [vmem:[#allocation6 + $0x4] sm:$0xf]
    %v57 = vld [vmem:[#allocation6 + $0x8] sm:$0xf]
    %v58 = vld [vmem:[#allocation6 + $0xc] sm:$0xf]
    %v61 = vunpack.c.l.b16 %v53
    %v62 = vunpack.c.l.b16 %v54
    %v63 = vpack.c.b16 %v62, %v61
    %v68 = vunpack.c.l.b16 %v55
    %v69 = vunpack.c.l.b16 %v56
    %v70 = vunpack.c.l.b16 %v57
    %v71 = vunpack.c.l.b16 %v58
    %v72 = vpack.c.b16 %v69, %v68
    %v73 = vpack.c.b16 %v71, %v70
    %vm76 = vcmask 261120
    %v78 = vsel %vm76, %v63, 0
    %80 = vmatprep.subr.bf16.mxu0 0
    %81 = vmatpush1.bf16.msra.mxu0 %v72
    %82 = vmatprep.subr.bf16.mxu0 0
    %83 = vmatpush1.bf16.msra.mxu0 %v73
    %84 = vmatprep.subr.bf16.mxu0 0
    %85 = vmatpush1.bf16.msra.mxu0 0
    %86 = vmatprep.subr.bf16.mxu0 0
    %87 = vmatpush1.bf16.msra.mxu0 0
    %88 = vmatprep.subr.bf16.mxu0 0
    %89 = vmatpush1.bf16.msra.mxu0 0
    %90 = vmatprep.subr.bf16.mxu0 0
    %91 = vmatpush1.bf16.msra.mxu0 0
    %92 = vmatprep.subr.bf16.mxu0 0
    %93 = vmatpush1.bf16.msra.mxu0 0
    %94 = vmatprep.subr.bf16.mxu0 0
    %95 = vmatpush1.bf16.msra.mxu0 0
    %96 = vmatprep.subr.bf16.mxu0 0
    %97 = vmatpush1.bf16.msra.mxu0 0
    %98 = vmatprep.subr.bf16.mxu0 0
    %99 = vmatpush1.bf16.msra.mxu0 0
    %100 = vmatprep.subr.bf16.mxu0 0
    %101 = vmatpush1.bf16.msra.mxu0 0
    %102 = vmatprep.subr.bf16.mxu0 0
    %103 = vmatpush1.bf16.msra.mxu0 0
    %104 = vmatprep.subr.bf16.mxu0 0
    %105 = vmatpush1.bf16.msra.mxu0 0
    %106 = vmatprep.subr.bf16.mxu0 0
    %107 = vmatpush1.bf16.msra.mxu0 0
    %108 = vmatprep.subr.bf16.mxu0 0
    %109 = vmatpush1.bf16.msra.mxu0 0
    %110 = vmatprep.subr.bf16.mxu0 0
    %111 = vmatpush1.bf16.msra.mxu0 0
    %112 = vmatprep.mubr.bf16.mxu0 0
    %113 = vmatmul.mubr.bf16.gmra.mrb[0].mxu0 %v78
    %v114 = vpop.f32.mrb[0].mxu0
    %v115 = vadd.f32 0.0, %v114
    %v116 = vpop.f32.mrb[0].mxu0
    %v117 = vpop.f32.mrb[0].mxu0
    %v118 = vadd.f32 0.0, %v117
    %v119 = vpop.f32.mrb[0].mxu0
    %120 = vdwg.mxu0
    %v121 = vadd.f32 %v51, %v115
    %v122 = vadd.f32 %v52, %v118
    %vm123 = vcmask 785408
    %124 = vst.msk [vmem:[#allocation2] sm:$0xff] %vm123, %v121
    %125 = vst.msk [vmem:[#allocation2 + $0x8] sm:$0xff] %vm123, %v122
    // Predicated region
    $region26: #{tpu_custom_call.1} parent=1 // pred_check
      %p126 = pneg %p44
    $region27: #{tpu_custom_call.1} parent=1 // pred_check_branch
      %128 = sbr.rel (%p126) target = $region29
    $region28: #{tpu_custom_call.1} parent=1 // pred_region
      %v129 = vld [vmem:[#allocation2] sm:$0xff]
      %v130 = vld [vmem:[#allocation2 + $0x8] sm:$0xff]
      %v131 = vld [vmem:[%s2] sm:$0x1]
      %v133 = vlaneseq
      %v134 = vshrl.u32 %v133, 7
      %v135 = vsub.s32 0, %v134
      %v136 = vrot.slane %v131, %v135
      %v138 = vadd.f32 %v129, %v136
      %v139 = vadd.f32 %v130, %v136
      %v140 = vpack.c.bf16 %v139, %v138
      %v142 = vunpack.c.l.b16 %v140
      %v143 = vunpack.c.h.b16 %v140
      %v144 = vpack.c.b16 %v142, %v142
      %v145 = vpack.c.b16 %v143, %v143
      %vm148 = vcmask 781312
      %149 = vst.msk [vmem:[#allocation8] sm:$0xf] %vm148, %v144
      %150 = vst.msk [vmem:[#allocation8 + $0x4] sm:$0xf] %vm148, %v145
    $region29: #{tpu_custom_call.1} parent=1 // pred_fallthru
      _
    // Predicated region
    $region30: #{tpu_custom_call.1} parent=1 // pred_check
      _
    $region31: #{tpu_custom_call.1} parent=1 // pred_check_branch
      %152 = sbr.rel (0) target = $region33
    $region32: #{tpu_custom_call.1} parent=1 // pred_region
      %s154 = ssub.s32 128, 128
      %155 = vsyncadd [#allocation5], %s154
      %s156 = sshll.u32 [#allocation8], 4
      %s157 = int_to_ptr.vmem [resolvable:$true] %s156
      %162 = dma.vmem_to_hbm [thread:$0]  %s157, 128, %s3, [#allocation5], 64, 64, 4
    $region33: #{tpu_custom_call.1} parent=1 // pred_fallthru
      _
    // Predicated region
    $region34: #{tpu_custom_call.1} parent=1 // pred_check
      _
    $region35: #{tpu_custom_call.1} parent=1 // pred_check_branch
      %164 = sbr.rel (0) target = $region37
    $region36: #{tpu_custom_call.1} parent=1 // pred_region
      %165 = dma.done [#allocation5], 128
    $region37: #{tpu_custom_call.1} parent=1 // pred_fallthru
      _
    %166 = vsyncpa [#allocation4], 1
    %167 = vsyncpa [#allocation7], 1
    %168 = vsyncpa [#allocation5], 1

</llo_original>
